<compile_context>
chip_gen: v7x
topology: tpu7x:2x2x1
jax: 0.10.0
libtpu: 0.0.40
codegen_flags: <defaults>
</compile_context>

<pallas_src>
import functools

import jax
import jax.numpy as jnp
from jax import lax
from jax.experimental import pallas as pl
from jax.experimental.pallas import tpu as pltpu


def _ptflow_kernel(coords_ref, at_ref, pre_tab_t_ref, wst_t_ref, bst_t_ref,
                   out_ref, ssum_ref, *, reverse: bool, sentinel: int):
    x = coords_ref[...]                                    # (3, TR)  f32
    at = at_ref[...]                                       # (1, TR)  int32
    rows = x.shape[1]
    a_pad = pre_tab_t_ref.shape[1]

    # Atom-type "gather" as a one-hot matmul against the tiny per-type table
    # (temperature features already folded into the table columns).
    onehot_t = (lax.broadcasted_iota(jnp.int32, (a_pad, rows), 0) == at
                ).astype(jnp.float32)                      # (A, TR)
    hid_t = jax.nn.gelu(jnp.dot(pre_tab_t_ref[...], onehot_t,
                                preferred_element_type=jnp.float32))  # (H, TR)

    # Validity mask derived from the sentinel atom type (no mask input stream).
    mask = (at != sentinel).astype(jnp.float32)            # (1, TR)

    # Fused scale/shift projection: one (8, H) @ (H, TR) matmul;
    # rows 0:3 = scale, 3:6 = shift, 6:8 = zero padding.
    ss_t = (jnp.dot(wst_t_ref[...], hid_t,
                    preferred_element_type=jnp.float32)
            + bst_t_ref[...]) * mask                       # (8, TR)
    scale = ss_t[0:3, :]
    shift = ss_t[3:6, :]

    if reverse:
        y = (x - shift) * jnp.exp(-scale)
        sgn = -1.0
    else:
        y = x * jnp.exp(scale) + shift
        sgn = 1.0

    out_ref[...] = y.astype(out_ref.dtype)                 # (3, TR) lane-dense
    # Per-row signed scale-sum; the per-molecule segment reduction happens in
    # the JAX wrapper (reshape (B, N) + sum) where XLA fuses it.
    ssum_ref[...] = sgn * jnp.sum(scale, axis=0, keepdims=True)   # (1, TR)


class AffinePTFlowPallas:
    """Concrete PTFlow layer: masked, temperature-conditioned affine flow."""

    def __init__(self, num_atom_types=5, hidden=32, key=jax.random.PRNGKey(0)):
        self.hidden = hidden
        self.num_atom_types = num_atom_types
        self.din = hidden + 2                      # atom embedding + 2 temp feats
        k0, k1, k2, k3 = jax.random.split(key, 4)
        s = 0.1
        self.emb = s * jax.random.normal(k0, (num_atom_types, hidden), jnp.float32)
        self.w1 = s * jax.random.normal(k1, (self.din, hidden), jnp.float32)
        self.b1 = jnp.zeros((1, hidden), jnp.float32)
        self.ws = s * jax.random.normal(k2, (hidden, 3), jnp.float32)
        self.bs = jnp.zeros((1, 3), jnp.float32)
        self.wt = s * jax.random.normal(k3, (hidden, 3), jnp.float32)
        self.bt = jnp.zeros((1, 3), jnp.float32)

    # ---------------------------------------------------------------- helpers
    @staticmethod
    def _pick_tr(total_rows: int) -> int:
        """Lane-dense tile width along B*N: a multiple of 128 that divides
        total_rows (or the full extent when it is not 128-aligned).  Target
        ~8K rows/step to amortize the ~0.35 us per-step cost, but keep >= 2
        grid steps when possible so the "parallel" axis can shard across
        v7x's two TensorCores."""
        if total_rows % 128 != 0:
            return total_rows                      # full-extent block is legal
        target = 8192
        cands = [m for m in range(128, total_rows + 1, 128)
                 if total_rows % m == 0]
        multi = [m for m in cands if m <= target and total_rows // m >= 2]
        if multi:
            return max(multi)
        small = [m for m in cands if m <= target]
        return max(small) if small else total_rows

    def _folded_tables(self, source_temp, target_temp):
        """Fold constant temperature features into the first-layer bias,
        precompute the transposed per-atom-type pre-activation table (H, A),
        and fuse scale/shift weights into one transposed (8, H) matrix."""
        H, A = self.hidden, self.num_atom_types
        st = 1.0 if source_temp is None else float(source_temp)
        tt = 1.0 if target_temp is None else float(target_temp)
        temps = jnp.array([[st, tt]], jnp.float32)                 # (1, 2)
        b1_eff = self.b1 + temps @ self.w1[H:, :]                  # (1, H)
        pre = self.emb @ self.w1[:H, :] + b1_eff                   # (A, H)
        # Pad type axis to a multiple of 8; sentinel (masked) row stays zero.
        a_pad = ((A + 1 + 7) // 8) * 8
        pre_tab_t = jnp.zeros((H, a_pad), jnp.float32).at[:, :A].set(pre.T)
        w_st_t = jnp.zeros((8, H), jnp.float32)
        w_st_t = w_st_t.at[0:3, :].set(self.ws.T).at[3:6, :].set(self.wt.T)
        b_st_t = jnp.zeros((8, 1), jnp.float32)
        b_st_t = b_st_t.at[0:3, 0].set(self.bs[0]).at[3:6, 0].set(self.bt[0])
        return pre_tab_t, w_st_t, b_st_t, a_pad

    # ---------------------------------------------------------------- forward
    def forward(self, coordinates, atom_types, adj_list, edge_batch_idx,
                masked_elements, log_det=None, reverse=False,
                source_temp=None, target_temp=None, **kwargs):
        del adj_list, edge_batch_idx  # TODO(synk): graph conditioning unused.
        B, N, _ = coordinates.shape
        H = self.hidden
        BN = B * N
        if log_det is None:
            log_det = jnp.zeros((B,), jnp.float32)

        pre_tab_t, w_st_t, b_st_t, a_pad = self._folded_tables(
            source_temp, target_temp)
        sentinel = self.num_atom_types           # zero row of the padded table

        TR = self._pick_tr(BN)
        grid = (BN // TR,)

        # Lane-dense inputs: rows (atoms) on the 128-lane axis.
        coords_t = coordinates.reshape(BN, 3).T                      # (3, BN)
        at_t = jnp.where(masked_elements,
                         jnp.int32(sentinel),
                         atom_types.astype(jnp.int32)).reshape(1, BN)

        kernel = functools.partial(_ptflow_kernel, reverse=bool(reverse),
                                   sentinel=sentinel)
        out_t, ssum = pl.pallas_call(
            kernel,
            grid=grid,
            in_specs=[
                pl.BlockSpec((3, TR), lambda i: (0, i)),       # coordinates
                pl.BlockSpec((1, TR), lambda i: (0, i)),       # atom types
                pl.BlockSpec((H, a_pad), lambda i: (0, 0)),    # per-type table^T
                pl.BlockSpec((8, H), lambda i: (0, 0)),        # fused W^T
                pl.BlockSpec((8, 1), lambda i: (0, 0)),        # fused bias
            ],
            out_specs=[
                pl.BlockSpec((3, TR), lambda i: (0, i)),       # new coordinates
                pl.BlockSpec((1, TR), lambda i: (0, i)),       # per-row +/-scale sum
            ],
            out_shape=[
                jax.ShapeDtypeStruct((3, BN), coordinates.dtype),
                jax.ShapeDtypeStruct((1, BN), jnp.float32),
            ],
            compiler_params=pltpu.CompilerParams(
                dimension_semantics=("parallel",)),
        )(coords_t, at_t, pre_tab_t, w_st_t, b_st_t)

        out_coords = out_t.T.reshape(B, N, 3)
        ld_out = log_det + ssum.reshape(B, N).sum(axis=1)
        return out_coords, ld_out

    # --------------------------------------------------------- pure-JAX check
    def reference(self, coordinates, atom_types, masked_elements, log_det,
                  reverse, source_temp, target_temp):
        B, N = atom_types.shape
        st = 1.0 if source_temp is None else float(source_temp)
        tt = 1.0 if target_temp is None else float(target_temp)
        emb = self.emb[atom_types]                                   # (B, N, H)
        temps = jnp.broadcast_to(jnp.array([st, tt], jnp.float32), (B, N, 2))
        h = jnp.concatenate([emb, temps], axis=-1)                   # (B, N, Din)
        mask = (~masked_elements).astype(jnp.float32)[..., None]     # (B, N, 1)
        hid = jax.nn.gelu(jnp.einsum('bnd,dh->bnh', h, self.w1) + self.b1)
        scale = (jnp.einsum('bnh,hk->bnk', hid, self.ws) + self.bs) * mask
        shift = (jnp.einsum('bnh,hk->bnk', hid, self.wt) + self.bt) * mask
        if reverse:
            y = (coordinates - shift) * jnp.exp(-scale)
            ld = log_det - jnp.sum(scale, axis=(1, 2))
        else:
            y = coordinates * jnp.exp(scale) + shift
            ld = log_det + jnp.sum(scale, axis=(1, 2))
        return y, ld


if __name__ == "__main__":
    flow = AffinePTFlowPallas(num_atom_types=5, hidden=32,
                              key=jax.random.PRNGKey(0))

    ok = True
    # Two configs: (a) tiny (full-extent single block), (b) 128-aligned rows
    # exercising the lane-dense tiled grid path (BN=256 -> TR=128, grid=(2,)).
    for (B, N, E, n_pad) in ((2, 8, 10, 2), (8, 32, 12, 3)):
        key = jax.random.PRNGKey(0)
        k_c, k_t, k_e, k_l = jax.random.split(key, 4)

        coordinates = jax.random.normal(k_c, (B, N, 3), jnp.float32)
        atom_types = jax.random.randint(k_t, (B, N), 0, 5)
        adj_list = jax.random.randint(k_e, (E, 2), 0, N)     # unused (see TODO)
        edge_batch_idx = jnp.zeros((E,), jnp.int32)          # unused (see TODO)
        masked_elements = jnp.zeros((B, N), bool).at[:, N - n_pad:].set(True)
        log_det = jax.random.normal(k_l, (B,), jnp.float32)

        for rev in (False, True):
            out_coords, ld = flow.forward(
                coordinates, atom_types, adj_list, edge_batch_idx,
                masked_elements, log_det=log_det, reverse=rev,
                source_temp=1.0, target_temp=1.5)
            jax.block_until_ready((out_coords, ld))

            ref_coords, ref_ld = flow.reference(
                coordinates, atom_types, masked_elements, log_det,
                reverse=rev, source_temp=1.0, target_temp=1.5)
            ok &= bool(jnp.allclose(out_coords, ref_coords, atol=1e-4, rtol=1e-4))
            ok &= bool(jnp.allclose(ld, ref_ld, atol=1e-4, rtol=1e-4))

    assert ok
    print("KERNEL_OK")
</pallas_src>

<mosaic_0001>
module attributes {stable_mosaic.version = 11 : i64} {
  func.func @_ptflow_kernel(%arg0: i32, %arg1: memref<3x16xf32, #tpu.memory_space<vmem>>, %arg2: memref<1x16xi32, #tpu.memory_space<vmem>>, %arg3: memref<32x8xf32, #tpu.memory_space<vmem>>, %arg4: memref<8x32xf32, #tpu.memory_space<vmem>>, %arg5: memref<8x1xf32, #tpu.memory_space<vmem>>, %arg6: memref<3x16xf32, #tpu.memory_space<vmem>>, %arg7: memref<1x16xf32, #tpu.memory_space<vmem>>) attributes {dimension_semantics = [#tpu.dimension_semantics<parallel>], iteration_bounds = array<i64: 1>, scalar_prefetch = 0 : i64, scratch_operands = 0 : i64, tpu.core_type = #tpu.core_type<tc>, window_params = [{transform_indices = @transform_0, window_bounds = array<i64: 3, 16>}, {transform_indices = @transform_1, window_bounds = array<i64: 1, 16>}, {pipeline_mode = #tpu.pipeline_mode<synchronous>, transform_indices = @transform_2, window_bounds = array<i64: 32, 8>}, {pipeline_mode = #tpu.pipeline_mode<synchronous>, transform_indices = @transform_3, window_bounds = array<i64: 8, 32>}, {pipeline_mode = #tpu.pipeline_mode<synchronous>, transform_indices = @transform_4, window_bounds = array<i64: 8, 1>}, {transform_indices = @transform_5, window_bounds = array<i64: 3, 16>}, {transform_indices = @transform_6, window_bounds = array<i64: 1, 16>}]} {
    %c0 = arith.constant 0 : index
    %c0_0 = arith.constant 0 : index
    %0 = vector.load %arg1[%c0, %c0_0] : memref<3x16xf32, #tpu.memory_space<vmem>>, vector<3x16xf32>
    %c0_1 = arith.constant 0 : index
    %c0_2 = arith.constant 0 : index
    %1 = vector.load %arg2[%c0_1, %c0_2] : memref<1x16xi32, #tpu.memory_space<vmem>>, vector<1x16xi32>
    %2 = tpu.iota {dimensions = array<i32: 0>} : vector<8x16xi32>
    %3 = vector.broadcast %1 : vector<1x16xi32> to vector<8x16xi32>
    %4 = arith.cmpi eq, %2, %3 : vector<8x16xi32>
    %5 = arith.extui %4 : vector<8x16xi1> to vector<8x16xi32>
    %6 = arith.sitofp %5 : vector<8x16xi32> to vector<8x16xf32>
    %c0_3 = arith.constant 0 : index
    %c0_4 = arith.constant 0 : index
    %7 = vector.load %arg3[%c0_3, %c0_4] : memref<32x8xf32, #tpu.memory_space<vmem>>, vector<32x8xf32>
    %cst = arith.constant dense<0.000000e+00> : vector<32x16xf32>
    %8 = tpu.matmul %7, %6, %cst {dimension_numbers = #tpu.dot_dimension_numbers<[1], [0], [0], [1], [0, 0, 1, 1], [], []>} : vector<32x8xf32>, vector<8x16xf32>, vector<32x16xf32> -> vector<32x16xf32>
    %9 = arith.mulf %8, %8 : vector<32x16xf32>
    %10 = arith.mulf %8, %9 : vector<32x16xf32>
    %cst_5 = arith.constant 4.471500e-02 : f32
    %11 = vector.broadcast %cst_5 : f32 to vector<32x16xf32>
    %12 = arith.mulf %11, %10 : vector<32x16xf32>
    %13 = arith.addf %8, %12 : vector<32x16xf32>
    %cst_6 = arith.constant 0.797884583 : f32
    %14 = vector.broadcast %cst_6 : f32 to vector<32x16xf32>
    %15 = arith.mulf %14, %13 : vector<32x16xf32>
    %16 = math.tanh %15 : vector<32x16xf32>
    %cst_7 = arith.constant 1.000000e+00 : f32
    %17 = vector.broadcast %cst_7 : f32 to vector<32x16xf32>
    %18 = arith.addf %17, %16 : vector<32x16xf32>
    %cst_8 = arith.constant 5.000000e-01 : f32
    %19 = vector.broadcast %cst_8 : f32 to vector<32x16xf32>
    %20 = arith.mulf %19, %18 : vector<32x16xf32>
    %21 = arith.mulf %8, %20 : vector<32x16xf32>
    %c5_i32 = arith.constant 5 : i32
    %22 = vector.broadcast %c5_i32 : i32 to vector<1x16xi32>
    %23 = arith.cmpi ne, %1, %22 : vector<1x16xi32>
    %24 = arith.extui %23 : vector<1x16xi1> to vector<1x16xi32>
    %25 = arith.sitofp %24 : vector<1x16xi32> to vector<1x16xf32>
    %c0_9 = arith.constant 0 : index
    %c0_10 = arith.constant 0 : index
    %26 = vector.load %arg4[%c0_9, %c0_10] : memref<8x32xf32, #tpu.memory_space<vmem>>, vector<8x32xf32>
    %cst_11 = arith.constant dense<0.000000e+00> : vector<8x16xf32>
    %27 = tpu.matmul %26, %21, %cst_11 {dimension_numbers = #tpu.dot_dimension_numbers<[1], [0], [0], [1], [0, 0, 1, 1], [], []>} : vector<8x32xf32>, vector<32x16xf32>, vector<8x16xf32> -> vector<8x16xf32>
    %c0_12 = arith.constant 0 : index
    %c0_13 = arith.constant 0 : index
    %28 = vector.load %arg5[%c0_12, %c0_13] : memref<8x1xf32, #tpu.memory_space<vmem>>, vector<8x1xf32>
    %29 = vector.broadcast %28 : vector<8x1xf32> to vector<8x16xf32>
    %30 = arith.addf %27, %29 : vector<8x16xf32>
    %31 = vector.broadcast %25 : vector<1x16xf32> to vector<8x16xf32>
    %32 = arith.mulf %30, %31 : vector<8x16xf32>
    %33 = vector.extract_strided_slice %32 {offsets = [0, 0], sizes = [3, 16], strides = [1, 1]} : vector<8x16xf32> to vector<3x16xf32>
    %34 = vector.extract_strided_slice %32 {offsets = [3, 0], sizes = [3, 16], strides = [1, 1]} : vector<8x16xf32> to vector<3x16xf32>
    %35 = math.exp %33 : vector<3x16xf32>
    %36 = arith.mulf %0, %35 : vector<3x16xf32>
    %37 = arith.addf %36, %34 : vector<3x16xf32>
    %c0_14 = arith.constant 0 : index
    %c0_15 = arith.constant 0 : index
    %38 = vector.load %arg6[%c0_14, %c0_15] : memref<3x16xf32, #tpu.memory_space<vmem>>, vector<3x16xf32>
    tpu.vector_store %arg6[%c0_14, %c0_15], %37 {strides = array<i32>} : memref<3x16xf32, #tpu.memory_space<vmem>>, vector<3x16xf32>,
    %cst_16 = arith.constant dense<0.000000e+00> : vector<16xf32>
    %39 = vector.multi_reduction <add>, %33, %cst_16 [0] : vector<3x16xf32> to vector<16xf32>
    %40 = vector.shape_cast %39 : vector<16xf32> to vector<1x16xf32>
    %cst_17 = arith.constant 1.000000e+00 : f32
    %41 = vector.broadcast %cst_17 : f32 to vector<1x16xf32>
    %42 = arith.mulf %41, %40 : vector<1x16xf32>
    %c0_18 = arith.constant 0 : index
    %c0_19 = arith.constant 0 : index
    %43 = vector.load %arg7[%c0_18, %c0_19] : memref<1x16xf32, #tpu.memory_space<vmem>>, vector<1x16xf32>
    tpu.vector_store %arg7[%c0_18, %c0_19], %42 {strides = array<i32>} : memref<1x16xf32, #tpu.memory_space<vmem>>, vector<1x16xf32>,
    return
  }
  func.func @transform_0(%arg0: i32) -> (i32, i32) {
    %c0_i32 = arith.constant 0 : i32
    %c0_i32_0 = arith.constant 0 : i32
    return %c0_i32, %arg0 : i32, i32
  }
  func.func @transform_1(%arg0: i32) -> (i32, i32) {
    %c0_i32 = arith.constant 0 : i32
    %c0_i32_0 = arith.constant 0 : i32
    return %c0_i32, %arg0 : i32, i32
  }
  func.func @transform_2(%arg0: i32) -> (i32, i32) {
    %c0_i32 = arith.constant 0 : i32
    %c0_i32_0 = arith.constant 0 : i32
    %c0_i32_1 = arith.constant 0 : i32
    return %c0_i32, %c0_i32_0 : i32, i32
  }
  func.func @transform_3(%arg0: i32) -> (i32, i32) {
    %c0_i32 = arith.constant 0 : i32
    %c0_i32_0 = arith.constant 0 : i32
    %c0_i32_1 = arith.constant 0 : i32
    return %c0_i32, %c0_i32_0 : i32, i32
  }
  func.func @transform_4(%arg0: i32) -> (i32, i32) {
    %c0_i32 = arith.constant 0 : i32
    %c0_i32_0 = arith.constant 0 : i32
    %c0_i32_1 = arith.constant 0 : i32
    return %c0_i32, %c0_i32_0 : i32, i32
  }
  func.func @transform_5(%arg0: i32) -> (i32, i32) {
    %c0_i32 = arith.constant 0 : i32
    %c0_i32_0 = arith.constant 0 : i32
    return %c0_i32, %arg0 : i32, i32
  }
  func.func @transform_6(%arg0: i32) -> (i32, i32) {
    %c0_i32 = arith.constant 0 : i32
    %c0_i32_0 = arith.constant 0 : i32
    return %c0_i32, %arg0 : i32, i32
  }
}

</mosaic_0001>

<llo_original>
// kernel: tpu_custom_call.1
$region0: #{tpu_custom_call.1}
  #allocation0 [shape = 'u32[]', space=smem, size = 0x4, offset = 0x4, fixed_abs, tag = 'smem constant byte address 0x4 - core index']
  #allocation1 [shape = 'u32[144,128]{1,0:T(1,128)}', space=vmem, size = 0x12000, scoped, tag = 'internal scratch']
  %s0 = inlined_call_operand.vmem [shape: f32[3,16], index: 0, kind: input, shape index: {}]
  %s1 = inlined_call_operand.vmem [shape: s32[1,16], index: 1, kind: input, shape index: {}]
  %s2 = inlined_call_operand.vmem [shape: f32[32,8], index: 2, kind: input, shape index: {}]
  %s3 = inlined_call_operand.vmem [shape: f32[8,32], index: 3, kind: input, shape index: {}]
  %s4 = inlined_call_operand.vmem [shape: f32[8,1], index: 4, kind: input, shape index: {}]
  %s5 = inlined_call_operand.hbm [shape: f32[3,16], index: 5, kind: output, shape index: {0}]
  %s6 = inlined_call_operand.hbm [shape: f32[1,16], index: 6, kind: output, shape index: {1}]
  %7 = xla_tuple %s5, %s6
  %s8 = sld [smem:[#allocation0]]
  $region38: #{tpu_custom_call.1} parent=0
    _
  %s10 = ssub.s32 1, %s8
  %s11 = scalar_select 0, %s10, %s8
  $region1: #{tpu_custom_call.1} parent=0
    #allocation2 [shape = 'u8[2048]{0}', space=vmem, size = 0x800, scoped, tag = 'output window, operand 0, single buffered']
    #allocation3 [shape = 's32[1]{0}', space=sflag, size = 0x4, scoped, tag = 'scoped memory for tpu_custom_call.1']
    #allocation4 [shape = 'u8[512]{0}', space=vmem, size = 0x400, scoped, tag = 'output window, operand 1, single buffered']
    #allocation5 [shape = 's32[1]{0}', space=sflag, size = 0x4, scoped, tag = 'scoped memory for tpu_custom_call.1']
    %12 = vsyncpa [#allocation3], 0
    %13 = vsyncpa [#allocation5], 0
    // Predicated region
    $region2: #{tpu_custom_call.1} parent=1 // pred_check
      _
    $region3: #{tpu_custom_call.1} parent=1 // pred_check_branch
      %15 = sbr.rel (0) target = $region5
    $region4: #{tpu_custom_call.1} parent=1 // pred_region
      _
    $region5: #{tpu_custom_call.1} parent=1 // pred_fallthru
      _
    // Predicated region
    $region6: #{tpu_custom_call.1} parent=1 // pred_check
      _
    $region7: #{tpu_custom_call.1} parent=1 // pred_check_branch
      %17 = sbr.rel (0) target = $region9
    $region8: #{tpu_custom_call.1} parent=1 // pred_region
      _
    $region9: #{tpu_custom_call.1} parent=1 // pred_fallthru
      _
    // Predicated region
    $region10: #{tpu_custom_call.1} parent=1 // pred_check
      _
    $region11: #{tpu_custom_call.1} parent=1 // pred_check_branch
      %19 = sbr.rel (0) target = $region13
    $region12: #{tpu_custom_call.1} parent=1 // pred_region
      _
    $region13: #{tpu_custom_call.1} parent=1 // pred_fallthru
      _
    // Predicated region
    $region14: #{tpu_custom_call.1} parent=1 // pred_check
      _
    $region15: #{tpu_custom_call.1} parent=1 // pred_check_branch
      %21 = sbr.rel (0) target = $region17
    $region16: #{tpu_custom_call.1} parent=1 // pred_region
      _
    $region17: #{tpu_custom_call.1} parent=1 // pred_fallthru
      _
    // Predicated region
    $region18: #{tpu_custom_call.1} parent=1 // pred_check
      _
    $region19: #{tpu_custom_call.1} parent=1 // pred_check_branch
      %23 = sbr.rel (0) target = $region21
    $region20: #{tpu_custom_call.1} parent=1 // pred_region
      _
    $region21: #{tpu_custom_call.1} parent=1 // pred_fallthru
      _
    %v24 = vld [vmem:[%s0] sm:$0x7]
    %v25 = vld [vmem:[%s1] sm:$0x1]
    %v26 = vlaneseq
    %v27 = vshrl.u32 %v26, 7
    %v28 = vlaneseq
    %v29 = vshrl.u32 %v28, 7
    %v30 = vsub.s32 0, %v29
    %v31 = vrot.slane %v25, %v30
    %vm32 = vcmp.eq.s32.totalorder %v27, %v31
    %v33 = vsel %vm32, 1, 0
    %v34 = vcvt.s32.f32 %v33
    %v35 = vld [vmem:[%s2] sm:$0xff]
    %v36 = vld [vmem:[%s2 + $0x8] sm:$0xff]
    %v37 = vld [vmem:[%s2 + $0x10] sm:$0xff]
    %v38 = vld [vmem:[%s2 + $0x18] sm:$0xff]
    %vm39 = vcmask 64512
    %v41 = vsel %vm39, %v35, 0
    %v44 = vsel %vm39, %v36, 0
    %v47 = vsel %vm39, %v37, 0
    %v50 = vsel %vm39, %v38, 0
    %52 = vmatprep.subr.mxu0 0.0
    %53 = vmatpush1.msra.mxu0 %v34
    %54 = vmatprep.subr.mxu0 0.0
    %55 = vmatpush1.msra.mxu0 0.0
    %56 = vmatprep.subr.mxu0 0.0
    %57 = vmatpush1.msra.mxu0 0.0
    %58 = vmatprep.subr.mxu0 0.0
    %59 = vmatpush1.msra.mxu0 0.0
    %60 = vmatprep.subr.mxu0 0.0
    %61 = vmatpush1.msra.mxu0 0.0
    %62 = vmatprep.subr.mxu0 0.0
    %63 = vmatpush1.msra.mxu0 0.0
    %64 = vmatprep.subr.mxu0 0.0
    %65 = vmatpush1.msra.mxu0 0.0
    %66 = vmatprep.subr.mxu0 0.0
    %67 = vmatpush1.msra.mxu0 0.0
    %68 = vmatprep.subr.mxu0 0.0
    %69 = vmatpush1.msra.mxu0 0.0
    %70 = vmatprep.subr.mxu0 0.0
    %71 = vmatpush1.msra.mxu0 0.0
    %72 = vmatprep.subr.mxu0 0.0
    %73 = vmatpush1.msra.mxu0 0.0
    %74 = vmatprep.subr.mxu0 0.0
    %75 = vmatpush1.msra.mxu0 0.0
    %76 = vmatprep.subr.mxu0 0.0
    %77 = vmatpush1.msra.mxu0 0.0
    %78 = vmatprep.subr.mxu0 0.0
    %79 = vmatpush1.msra.mxu0 0.0
    %80 = vmatprep.subr.mxu0 0.0
    %81 = vmatpush1.msra.mxu0 0.0
    %82 = vmatprep.subr.mxu0 0.0
    %83 = vmatpush1.msra.mxu0 0.0
    %84 = vmatprep.subr.mxu0 0.0
    %85 = vmatpush1.msra.mxu0 0.0
    %86 = vmatprep.subr.mxu0 0.0
    %87 = vmatpush1.msra.mxu0 0.0
    %88 = vmatprep.subr.mxu0 0.0
    %89 = vmatpush1.msra.mxu0 0.0
    %90 = vmatprep.subr.mxu0 0.0
    %91 = vmatpush1.msra.mxu0 0.0
    %92 = vmatprep.subr.mxu0 0.0
    %93 = vmatpush1.msra.mxu0 0.0
    %94 = vmatprep.subr.mxu0 0.0
    %95 = vmatpush1.msra.mxu0 0.0
    %96 = vmatprep.subr.mxu0 0.0
    %97 = vmatpush1.msra.mxu0 0.0
    %98 = vmatprep.subr.mxu0 0.0
    %99 = vmatpush1.msra.mxu0 0.0
    %100 = vmatprep.subr.mxu0 0.0
    %101 = vmatpush1.msra.mxu0 0.0
    %102 = vmatprep.subr.mxu0 0.0
    %103 = vmatpush1.msra.mxu0 0.0
    %104 = vmatprep.subr.mxu0 0.0
    %105 = vmatpush1.msra.mxu0 0.0
    %106 = vmatprep.subr.mxu0 0.0
    %107 = vmatpush1.msra.mxu0 0.0
    %108 = vmatprep.subr.mxu0 0.0
    %109 = vmatpush1.msra.mxu0 0.0
    %110 = vmatprep.subr.mxu0 0.0
    %111 = vmatpush1.msra.mxu0 0.0
    %112 = vmatprep.subr.mxu0 0.0
    %113 = vmatpush1.msra.mxu0 0.0
    %114 = vmatprep.subr.mxu0 0.0
    %115 = vmatpush1.msra.mxu0 0.0
    %116 = vmatprep.mubr.f32.mxu0 0.0
    %117 = vmatmul.mubr.f32.gmra.mrb[0].mxu0 %v41
    %v118 = vpop.f32.mrb[0].mxu0
    %v119 = vadd.f32 0.0, %v118
    %v120 = vpop.f32.mrb[0].mxu0
    %121 = vmatprep.mubr.f32.mxu0 0.0
    %122 = vmatmul.mubr.f32.gmra.mrb[0].mxu0 %v44
    %v123 = vpop.f32.mrb[0].mxu0
    %v124 = vadd.f32 0.0, %v123
    %v125 = vpop.f32.mrb[0].mxu0
    %126 = vmatprep.mubr.f32.mxu0 0.0
    %127 = vmatmul.mubr.f32.gmra.mrb[0].mxu0 %v47
    %v128 = vpop.f32.mrb[0].mxu0
    %v129 = vadd.f32 0.0, %v128
    %v130 = vpop.f32.mrb[0].mxu0
    %131 = vmatprep.mubr.f32.mxu0 0.0
    %132 = vmatmul.mubr.f32.gmra.mrb[0].mxu0 %v50
    %v133 = vpop.f32.mrb[0].mxu0
    %v134 = vadd.f32 0.0, %v133
    %v135 = vpop.f32.mrb[0].mxu0
    %136 = vdwg.mxu0
    %v137 = vmul.f32 %v119, %v119
    %v138 = vmul.f32 %v124, %v124
    %v139 = vmul.f32 %v129, %v129
    %v140 = vmul.f32 %v134, %v134
    %v141 = vmul.f32 %v119, %v137
    %v142 = vmul.f32 %v124, %v138
    %v143 = vmul.f32 %v129, %v139
    %v144 = vmul.f32 %v134, %v140
    %v145 = vmul.f32 %v141, 0.044715
    %v146 = vmul.f32 %v142, 0.044715
    %v147 = vmul.f32 %v143, 0.044715
    %v148 = vmul.f32 %v144, 0.044715
    %v149 = vadd.f32 %v119, %v145
    %v150 = vadd.f32 %v124, %v146
    %v151 = vadd.f32 %v129, %v147
    %v152 = vadd.f32 %v134, %v148
    %v153 = vmul.f32 %v149, 0.7978846
    %v154 = vmul.f32 %v150, 0.7978846
    %v155 = vmul.f32 %v151, 0.7978846
    %v156 = vmul.f32 %v152, 0.7978846
    %v157 = vtanh.pop %v153
    %v158 = vtanh.pop %v154
    %v159 = vtanh.pop %v155
    %v160 = vtanh.pop %v156
    %v161 = vadd.f32 %v157, 1.0
    %v162 = vadd.f32 %v158, 1.0
    %v163 = vadd.f32 %v159, 1.0
    %v164 = vadd.f32 %v160, 1.0
    %v165 = vmul.f32 %v161, 0.5
    %v166 = vmul.f32 %v162, 0.5
    %v167 = vmul.f32 %v163, 0.5
    %v168 = vmul.f32 %v164, 0.5
    %v169 = vmul.f32 %v119, %v165
    %v170 = vmul.f32 %v124, %v166
    %v171 = vmul.f32 %v129, %v167
    %v172 = vmul.f32 %v134, %v168
    %vm173 = vcmp.ne.s32.totalorder %v25, 5
    %v174 = vsel %vm173, 1, 0
    %v175 = vcvt.s32.f32 %v174
    %v176 = vld [vmem:[%s3] sm:$0xff]
    %v177 = vld [vmem:[%s4] sm:$0xff]
    %179 = vset.pattern.permute.xlu0 0
    %180 = vperm.xlu0 %179, %v177
    %v181 = vpop.permute.xlu0 %180
    %vm183 = vcmask 261120
    %v185 = vsel %vm183, %v176, 0
    %187 = vmatprep.subr.mxu0 0.0
    %188 = vmatpush1.msra.mxu0 %v169
    %189 = vmatprep.subr.mxu0 0.0
    %190 = vmatpush1.msra.mxu0 %v170
    %191 = vmatprep.subr.mxu0 0.0
    %192 = vmatpush1.msra.mxu0 %v171
    %193 = vmatprep.subr.mxu0 0.0
    %194 = vmatpush1.msra.mxu0 %v172
    %195 = vmatprep.subr.mxu0 0.0
    %196 = vmatpush1.msra.mxu0 0.0
    %197 = vmatprep.subr.mxu0 0.0
    %198 = vmatpush1.msra.mxu0 0.0
    %199 = vmatprep.subr.mxu0 0.0
    %200 = vmatpush1.msra.mxu0 0.0
    %201 = vmatprep.subr.mxu0 0.0
    %202 = vmatpush1.msra.mxu0 0.0
    %203 = vmatprep.subr.mxu0 0.0
    %204 = vmatpush1.msra.mxu0 0.0
    %205 = vmatprep.subr.mxu0 0.0
    %206 = vmatpush1.msra.mxu0 0.0
    %207 = vmatprep.subr.mxu0 0.0
    %208 = vmatpush1.msra.mxu0 0.0
    %209 = vmatprep.subr.mxu0 0.0
    %210 = vmatpush1.msra.mxu0 0.0
    %211 = vmatprep.subr.mxu0 0.0
    %212 = vmatpush1.msra.mxu0 0.0
    %213 = vmatprep.subr.mxu0 0.0
    %214 = vmatpush1.msra.mxu0 0.0
    %215 = vmatprep.subr.mxu0 0.0
    %216 = vmatpush1.msra.mxu0 0.0
    %217 = vmatprep.subr.mxu0 0.0
    %218 = vmatpush1.msra.mxu0 0.0
    %219 = vmatprep.subr.mxu0 0.0
    %220 = vmatpush1.msra.mxu0 0.0
    %221 = vmatprep.subr.mxu0 0.0
    %222 = vmatpush1.msra.mxu0 0.0
    %223 = vmatprep.subr.mxu0 0.0
    %224 = vmatpush1.msra.mxu0 0.0
    %225 = vmatprep.subr.mxu0 0.0
    %226 = vmatpush1.msra.mxu0 0.0
    %227 = vmatprep.subr.mxu0 0.0
    %228 = vmatpush1.msra.mxu0 0.0
    %229 = vmatprep.subr.mxu0 0.0
    %230 = vmatpush1.msra.mxu0 0.0
    %231 = vmatprep.subr.mxu0 0.0
    %232 = vmatpush1.msra.mxu0 0.0
    %233 = vmatprep.subr.mxu0 0.0
    %234 = vmatpush1.msra.mxu0 0.0
    %235 = vmatprep.subr.mxu0 0.0
    %236 = vmatpush1.msra.mxu0 0.0
    %237 = vmatprep.subr.mxu0 0.0
    %238 = vmatpush1.msra.mxu0 0.0
    %239 = vmatprep.subr.mxu0 0.0
    %240 = vmatpush1.msra.mxu0 0.0
    %241 = vmatprep.subr.mxu0 0.0
    %242 = vmatpush1.msra.mxu0 0.0
    %243 = vmatprep.subr.mxu0 0.0
    %244 = vmatpush1.msra.mxu0 0.0
    %245 = vmatprep.subr.mxu0 0.0
    %246 = vmatpush1.msra.mxu0 0.0
    %247 = vmatprep.subr.mxu0 0.0
    %248 = vmatpush1.msra.mxu0 0.0
    %249 = vmatprep.subr.mxu0 0.0
    %250 = vmatpush1.msra.mxu0 0.0
    %251 = vmatprep.mubr.f32.mxu0 0.0
    %252 = vmatmul.mubr.f32.gmra.mrb[0].mxu0 %v185
    %v253 = vpop.f32.mrb[0].mxu0
    %v254 = vadd.f32 %v181, %v253
    %v255 = vpop.f32.mrb[0].mxu0
    %256 = vdwg.mxu0
    %v258 = vlaneseq
    %v259 = vshrl.u32 %v258, 7
    %v260 = vsub.s32 0, %v259
    %v261 = vrot.slane %v175, %v260
    %v263 = vmul.f32 %v254, %v261
    %v264 = vmul.f32 %v263, 1.442695
    %v265 = vpow.pop %v264
    %v266 = vmul.f32 %v24, %v265
    %v268 = vrot.slane %v263, 3
    %v270 = vadd.f32 %v266, %v268
    %vm271 = vcmask 124928
    %272 = vst.msk [vmem:[#allocation2] sm:$0x7] %vm271, %v270
    %v273 = vsel %vm271, %v263, 0.0
    %v274 = vrot.slane %v273, 4
    %v275 = vadd.f32 %v273, %v274
    %v276 = vrot.slane %v275, 2
    %v277 = vadd.f32 %v275, %v276
    %v278 = vrot.slane %v277, 1
    %v279 = vadd.f32 %v277, %v278
    %vm280 = vcmask 122880
    %281 = vst.msk [vmem:[#allocation4] sm:$0x1] %vm280, %v279
    // Predicated region
    $region22: #{tpu_custom_call.1} parent=1 // pred_check
      _
    $region23: #{tpu_custom_call.1} parent=1 // pred_check_branch
      %283 = sbr.rel (0) target = $region25
    $region24: #{tpu_custom_call.1} parent=1 // pred_region
      %s285 = ssub.s32 64, 64
      %286 = vsyncadd [#allocation3], %s285
      %s288 = sshll.u32 [#allocation2], 4
      %s289 = int_to_ptr.vmem [resolvable:$true] %s288
      %291 = dma.vmem_to_hbm [thread:$0]  %s289, 64, %s5, [#allocation3]
    $region25: #{tpu_custom_call.1} parent=1 // pred_fallthru
      _
    // Predicated region
    $region26: #{tpu_custom_call.1} parent=1 // pred_check
      _
    $region27: #{tpu_custom_call.1} parent=1 // pred_check_branch
      %293 = sbr.rel (0) target = $region29
    $region28: #{tpu_custom_call.1} parent=1 // pred_region
      %s295 = ssub.s32 16, 16
      %296 = vsyncadd [#allocation5], %s295
      %s298 = sshll.u32 [#allocation4], 4
      %s299 = int_to_ptr.vmem [resolvable:$true] %s298
      %301 = dma.vmem_to_hbm [thread:$0]  %s299, 16, %s6, [#allocation5]
    $region29: #{tpu_custom_call.1} parent=1 // pred_fallthru
      _
    // Predicated region
    $region30: #{tpu_custom_call.1} parent=1 // pred_check
      _
    $region31: #{tpu_custom_call.1} parent=1 // pred_check_branch
      %303 = sbr.rel (0) target = $region33
    $region32: #{tpu_custom_call.1} parent=1 // pred_region
      %304 = dma.done [#allocation3], 64
    $region33: #{tpu_custom_call.1} parent=1 // pred_fallthru
      _
    // Predicated region
    $region34: #{tpu_custom_call.1} parent=1 // pred_check
      _
    $region35: #{tpu_custom_call.1} parent=1 // pred_check_branch
      %306 = sbr.rel (0) target = $region37
    $region36: #{tpu_custom_call.1} parent=1 // pred_region
      %307 = dma.done [#allocation5], 16
    $region37: #{tpu_custom_call.1} parent=1 // pred_fallthru
      _
    %308 = vsyncpa [#allocation3], 1
    %309 = vsyncpa [#allocation5], 1

</llo_original>
